<compile_context>
chip_gen: v6e
topology: v6e:2x2x1
jax: 0.10.0
libtpu: 0.0.40
codegen_flags: <defaults>
</compile_context>

<pallas_src>
import math
import numpy as np
import jax
import jax.numpy as jnp
from jax.experimental import pallas as pl
from jax.experimental.pallas import tpu as pltpu


# ----------------------------------------------------------------------------
# Pallas kernels
# ----------------------------------------------------------------------------

def _make_fused_kernel(use_cfg: bool, w_u: float, w_c: float,
                       scales, sigmas, n_loop: int):
    """One batch element, fully fused:
        for each denoise step k:
            z <- z + sigma_k * noise_k                 (add_noise, k >= 1)
            z <- scale_k * z                           (scale_model_input)
            cond = tanh(w_cond^T @ [temb|gemb|pooled]) (conditioning)
            eps_i = w_out^T @ tanh(w_in^T @ z + cond[:, i])   (synthetic UNet)
            z <- z + (1-w)*eps_u + w*eps_c             (CFG combine)
        mel  = tanh(w_vae^T @ z)                       (VAE 1x1-conv decode)
        wav  = tanh(sum_m mel[m] @ w_voc[m])           (vocoder projection)
    Latent is channels-major (C, HW): all loads/stores are 256-lane dense.
    MXU operands are bf16 where the reference UNet runs bf16-ish; accumulation
    and elementwise math stay f32.  scales / sigmas / w_u / w_c are Python
    floats baked in at trace time (they derive from static scheduler args)."""

    def kernel(z0_ref, noise_ref, ci_ref, wc_ref, wi_ref, wo_ref,
               wvae_ref, wvoc_ref, o_ref):
        ci_all = ci_ref[0]                               # (n_total, COND_IN, nh) f32

        def denoise(z, k):
            zs = z * scales[k]                           # scale_model_input
            zb = zs.astype(jnp.bfloat16)
            cond = jnp.tanh(
                jnp.dot(wc_ref[...], ci_all[k].astype(jnp.bfloat16),
                        preferred_element_type=jnp.float32))          # (HD, nh)
            zp = jnp.dot(wi_ref[...], zb,
                         preferred_element_type=jnp.float32)          # (HD, HW)

            def half(i):
                h = jnp.tanh(zp + cond[:, i:i + 1])                   # (HD, HW)
                return jnp.dot(wo_ref[...], h.astype(jnp.bfloat16),
                               preferred_element_type=jnp.float32)    # (C, HW)

            if use_cfg:
                # (1-w)*(zs+eps_u) + w*(zs+eps_c) == zs + (1-w)*eps_u + w*eps_c
                return zs + w_u * half(0) + w_c * half(1)
            return zs + half(0)

        z = denoise(z0_ref[0], 0)
        if n_loop > 0:
            noise_all = noise_ref[0]                     # (n_loop, C, HW)
            for j in range(n_loop):                      # static unroll
                z = denoise(z + sigmas[j] * noise_all[j], j + 1)

        # fused VAE 1x1-conv decode + vocoder; mel stays in vregs (no HBM trip).
        mel = jnp.tanh(jnp.dot(wvae_ref[...], z,
                               preferred_element_type=jnp.float32))   # (M, HW)
        nw = o_ref.shape[-1]
        acc = jnp.zeros((1, nw), jnp.float32)
        # static unroll over mel channels: avoids an in-kernel (M, HW) ->
        # (1, M*HW) cross-lane relayout before the vocoder matmul.
        for m in range(mel.shape[0]):
            acc = acc + jnp.dot(mel[m:m + 1, :], wvoc_ref[m],
                                preferred_element_type=jnp.float32)
        o_ref[0] = jnp.tanh(acc)

    return kernel


def _pallas_text_proj(a, w_pad, n_valid):
    """tanh(a @ w): the weight is zero-padded to a 128-lane output slab so the
    store is lane-dense; the valid columns are sliced back in the wrapper."""
    M = a.shape[0]
    Np = w_pad.shape[1]

    def kernel(a_ref, w_ref, o_ref):
        o_ref[...] = jnp.tanh(jnp.dot(a_ref[...], w_ref[...],
                                      preferred_element_type=jnp.float32))

    out = pl.pallas_call(
        kernel, out_shape=jax.ShapeDtypeStruct((M, Np), jnp.float32),
    )(a.astype(jnp.float32), w_pad)
    return out[:, :n_valid]


def sinusoidal_embed(x, dim):
    half = dim // 2
    freqs = jnp.exp(-math.log(10000.0) * jnp.arange(half, dtype=jnp.float32) / half)
    ang = jnp.asarray(x, jnp.float32)[..., None] * freqs
    return jnp.concatenate([jnp.sin(ang), jnp.cos(ang)], axis=-1)


# ----------------------------------------------------------------------------
# Synthetic ConsistencyTTA
# ----------------------------------------------------------------------------

class ConsistencyTTAPallas:
    # Small synthetic dimensions (original: latents (B, 8, 256, 16), T5-large D=1024)
    VOCAB = 64     # synthetic tokenizer vocab
    L = 8          # token sequence length
    D_TXT = 32     # text-encoder hidden size
    C = 4          # latent channels  (unet.config.in_channels)
    H = 16         # latent height    (orig 256)
    W = 16         # latent width     (orig 16)
    HD = 128       # unet hidden width
    M_MEL = 8      # mel channels out of the VAE decoder
    N_WAV = 256    # raw vocoder output length
    T_DIM = 32     # time / guidance embedding width
    COND_IN = 2 * T_DIM + D_TXT   # 96
    HW = H * W                    # 256

    def __init__(self, key):
        ks = jax.random.split(key, 8)

        def init(k, shape, scale):
            return jax.random.normal(k, shape, jnp.float32) * scale

        self.emb_table = init(ks[0], (self.VOCAB, self.D_TXT), 0.5)
        w_text = init(ks[1], (self.D_TXT, self.D_TXT), 1.0 / math.sqrt(self.D_TXT))
        # zero-pad the text-projection weight to 128 output lanes -> dense store
        self.w_text_pad = jnp.zeros((self.D_TXT, 128), jnp.float32) \
                             .at[:, :self.D_TXT].set(w_text)

        # UNet weights: transposed for the channels-major latent layout and
        # cast to bf16 ONCE (MXU operands; accumulation stays f32).
        w_cond = init(ks[2], (self.COND_IN, self.HD), 0.2)
        w_in = init(ks[3], (self.C, self.HD), 0.5)
        w_out = init(ks[4], (self.HD, self.C), 0.1)
        self.w_cond_T = w_cond.T.astype(jnp.bfloat16)   # (HD, COND_IN)
        self.w_in_T = w_in.T.astype(jnp.bfloat16)       # (HD, C)
        self.w_out_T = w_out.T.astype(jnp.bfloat16)     # (C, HD)

        # decode weights (run once per forward; kept f32 like vae.decode .float())
        w_vae = init(ks[5], (self.C, self.M_MEL), 0.5)
        self.w_vae_T = w_vae.T                                       # (M_MEL, C)
        w_voc = init(ks[6], (self.M_MEL * self.HW, self.N_WAV),
                     1.0 / math.sqrt(self.M_MEL * self.HW))
        self.w_voc_r = w_voc.reshape(self.M_MEL, self.HW, self.N_WAV)

        # jit the whole diffusion + decode path (single fused kernel launch).
        self._diffuse_decode_jit = jax.jit(
            self._diffuse_decode,
            static_argnames=("cfg_scale_input", "cfg_scale_post",
                             "num_steps", "use_cfg"))

    # --------------------------- text encoding -----------------------------
    def _tokenize(self, prompts):
        ids = np.zeros((len(prompts), self.L), dtype=np.int32)
        mask = np.zeros((len(prompts), self.L), dtype=np.float32)
        for i, p in enumerate(prompts):
            toks = [(ord(c) % (self.VOCAB - 1)) + 1 for c in p][: self.L]
            if not toks:
                toks = [1]  # eos for the empty (unconditional) prompt
            ids[i, : len(toks)] = toks
            mask[i, : len(toks)] = 1.0
        return jnp.asarray(ids), jnp.asarray(mask)

    def encode_text(self, prompts, max_length=None, padding=True):
        # TODO(synk): google/flan-t5-large replaced by a synthetic embedding +
        # tanh projection (max_length / padding accepted for API parity only).
        ids, mask = self._tokenize(prompts)
        emb = self.emb_table[ids]                                   # (B, L, D) gather (glue)
        Bq = emb.shape[0]
        proj = _pallas_text_proj(emb.reshape(Bq * self.L, self.D_TXT),
                                 self.w_text_pad, self.D_TXT)
        return proj.reshape(Bq, self.L, self.D_TXT), mask

    def encode_text_classifier_free(self, prompts, num_samples_per_prompt):
        cond_e, cond_m = self.encode_text(prompts)
        cond_e = jnp.repeat(cond_e, num_samples_per_prompt, axis=0)
        cond_m = jnp.repeat(cond_m, num_samples_per_prompt, axis=0)
        uncond = [""] * len(prompts)
        neg_e, neg_m = self.encode_text(uncond, max_length=self.L, padding="max_length")
        neg_e = jnp.repeat(neg_e, num_samples_per_prompt, axis=0)
        neg_m = jnp.repeat(neg_m, num_samples_per_prompt, axis=0)
        return (jnp.concatenate([neg_e, cond_e], axis=0),
                jnp.concatenate([neg_m, cond_m], axis=0),
                cond_e, cond_m)

    # --------------------------- scheduler (synthetic Heun/Karras) ---------
    @staticmethod
    def _set_timesteps_np(n, sigma_min=0.03, sigma_max=14.6, rho=7.0):
        num_points = 2 * n - 1 if n > 1 else 1
        timesteps = np.linspace(999.0, 0.0, num_points)
        ramp = np.linspace(0.0, 1.0, num_points)
        min_inv, max_inv = sigma_min ** (1.0 / rho), sigma_max ** (1.0 / rho)
        sigmas = (max_inv + ramp * (min_inv - max_inv)) ** rho
        return timesteps, sigmas

    # --------------------------- jitted diffusion + decode ------------------
    def _diffuse_decode(self, pooled_pair, key, *, cfg_scale_input,
                        cfg_scale_post, num_steps, use_cfg):
        B, nh, _ = pooled_pair.shape
        C, HW, T = self.C, self.HW, self.T_DIM

        key, k_noise = jax.random.split(key)
        noise0 = jax.random.normal(k_noise, (B, C, HW), jnp.float32)

        # Static scheduler tables: the first (consistency) query uses the fixed
        # 18-point Karras schedule, later queries use the num_steps schedule --
        # intentional, mirrors the reference which resets timesteps in between.
        ts18, sg18 = self._set_timesteps_np(18)
        ts, sg = self._set_timesteps_np(num_steps)
        loop_idx = list(range(1, len(ts), 2))
        n_loop = len(loop_idx)
        n_total = n_loop + 1

        step_ts = [float(ts18[0])] + [float(ts[i]) for i in loop_idx]
        step_sig = [float(sg18[0])] + [float(sg[i]) for i in loop_idx]
        scales = tuple(1.0 / math.sqrt(s * s + 1.0) for s in step_sig)  # scale_model_input
        sigmas = tuple(step_sig[1:])                                    # add_noise scales
        if use_cfg:
            w_u, w_c = 1.0 - float(cfg_scale_post), float(cfg_scale_post)
        else:
            w_u, w_c = 1.0, 0.0

        z0 = noise0 * step_sig[0]          # init_noise_sigma * noise (plain JAX)

        # conditioning inputs for every denoise step: (B, n_total, COND_IN, nh)
        gemb = sinusoidal_embed(jnp.full((1,), float(cfg_scale_input), jnp.float32), T)
        gp = jnp.concatenate(
            [jnp.broadcast_to(gemb[None], (B, nh, T)), pooled_pair], axis=-1)
        ci_steps = []
        for t in step_ts:
            temb = sinusoidal_embed(jnp.full((1,), float(t), jnp.float32), T)
            ci = jnp.concatenate(
                [jnp.broadcast_to(temb[None], (B, nh, T)), gp], axis=-1)  # (B,nh,96)
            ci_steps.append(jnp.transpose(ci, (0, 2, 1)))                 # (B,96,nh)
        ci_all = jnp.stack(ci_steps, axis=1)                              # (B,n_total,96,nh)

        # per-loop-step add_noise draws (plain jax.random, same semantics as ref)
        n_pad = max(n_loop, 1)
        if n_loop > 0:
            keys = jax.random.split(key, n_loop)
            noise_loop = jnp.stack(
                [jax.random.normal(keys[j], (B, C, HW), jnp.float32)
                 for j in range(n_loop)], axis=1)                         # (B,n_loop,C,HW)
        else:
            noise_loop = jnp.zeros((B, 1, C, HW), jnp.float32)            # dummy, unread

        kernel = _make_fused_kernel(bool(use_cfg), w_u, w_c, scales, sigmas, n_loop)
        # TODO(synk): at real ConsistencyTTA sizes (latents (B,8,256,16), real
        # HiFi-GAN) tile the vocoder matmul over K/N with a VMEM accumulator
        # instead of whole-array blocks (v7x has only 64 MiB VMEM).
        out = pl.pallas_call(
            kernel,
            out_shape=jax.ShapeDtypeStruct((B, 1, self.N_WAV), jnp.float32),
            grid=(B,),
            in_specs=[
                pl.BlockSpec((1, C, HW), lambda b: (b, 0, 0)),                     # z0
                pl.BlockSpec((1, n_pad, C, HW), lambda b: (b, 0, 0, 0)),           # loop noise
                pl.BlockSpec((1, n_total, self.COND_IN, nh), lambda b: (b, 0, 0, 0)),  # cond in
                pl.BlockSpec((self.HD, self.COND_IN), lambda b: (0, 0)),           # w_cond^T
                pl.BlockSpec((self.HD, C), lambda b: (0, 0)),                      # w_in^T
                pl.BlockSpec((C, self.HD), lambda b: (0, 0)),                      # w_out^T
                pl.BlockSpec((self.M_MEL, C), lambda b: (0, 0)),                   # w_vae^T
                pl.BlockSpec((self.M_MEL, HW, self.N_WAV), lambda b: (0, 0, 0)),   # w_voc
            ],
            out_specs=pl.BlockSpec((1, 1, self.N_WAV), lambda b: (b, 0, 0)),
            compiler_params=pltpu.CompilerParams(
                dimension_semantics=("parallel",)),     # batch axis -> 2nd TC on v7x
        )(z0, noise_loop, ci_all, self.w_cond_T, self.w_in_T, self.w_out_T,
          self.w_vae_T, self.w_voc_r)
        return out.reshape(B, self.N_WAV)

    # --------------------------- forward ------------------------------------
    def forward(self, prompt, cfg_scale_input=3.0, cfg_scale_post=1.0,
                num_steps=1, num_samples=1, sr=16000, key=None):
        if key is None:
            key = jax.random.PRNGKey(0)
        use_cfg = cfg_scale_post > 1.0

        pe_cf, pm_cf, pe, pm = self.encode_text_classifier_free(prompt, num_samples)
        enc_states, enc_mask = (pe_cf, pm_cf) if use_cfg else (pe, pm)

        # mask-weighted mean pooling of the text states (stand-in for the UNet
        # cross-attention); plain einsum -- a per-row 8x32 Pallas matmul is
        # pure launch overhead.
        w_mask = enc_mask / jnp.maximum(enc_mask.sum(-1, keepdims=True), 1.0)
        pooled = jnp.einsum("bl,bld->bd", w_mask, enc_states)

        B = len(prompt) * num_samples
        if use_cfg:
            pooled_pair = jnp.stack([pooled[:B], pooled[B:]], axis=1)  # (B,2,D) uncond/cond
        else:
            pooled_pair = pooled[:, None, :]                            # (B,1,D)

        wav = self._diffuse_decode_jit(
            pooled_pair, key,
            cfg_scale_input=float(cfg_scale_input),
            cfg_scale_post=float(cfg_scale_post),
            num_steps=int(num_steps),
            use_cfg=bool(use_cfg))
        return wav[:, : int(sr * 9.5)]


# ----------------------------------------------------------------------------
if __name__ == "__main__":
    key = jax.random.PRNGKey(0)
    model = ConsistencyTTAPallas(key)
    prompts = ["a dog barking", "rain falling on a tin roof"]
    wav = model.forward(prompts,
                        cfg_scale_input=3.0,
                        cfg_scale_post=3.0,   # > 1.0 -> exercises the CFG path
                        num_steps=2,
                        num_samples=1,
                        sr=16,                # small sr so the slice stays tiny
                        key=jax.random.PRNGKey(0))
    wav = jax.block_until_ready(wav)
    assert wav.shape == (2, int(16 * 9.5)), wav.shape
    assert bool(jnp.all(jnp.isfinite(wav)))
    print("KERNEL_OK")
</pallas_src>

<mosaic_0001>
module attributes {stable_mosaic.version = 11 : i64} {
  func.func @kernel(%arg0: memref<16x32xf32, #tpu.memory_space<vmem>>, %arg1: memref<32x128xf32, #tpu.memory_space<vmem>>, %arg2: memref<16x128xf32, #tpu.memory_space<vmem>>) attributes {dimension_semantics = [], scalar_prefetch = 0 : i64, scratch_operands = 0 : i64, tpu.core_type = #tpu.core_type<tc>} {
    %c0 = arith.constant 0 : index
    %c0_0 = arith.constant 0 : index
    %0 = vector.load %arg0[%c0, %c0_0] : memref<16x32xf32, #tpu.memory_space<vmem>>, vector<16x32xf32>
    %c0_1 = arith.constant 0 : index
    %c0_2 = arith.constant 0 : index
    %1 = vector.load %arg1[%c0_1, %c0_2] : memref<32x128xf32, #tpu.memory_space<vmem>>, vector<32x128xf32>
    %cst = arith.constant dense<0.000000e+00> : vector<16x128xf32>
    %2 = tpu.matmul %0, %1, %cst {dimension_numbers = #tpu.dot_dimension_numbers<[1], [0], [0], [1], [0, 0, 1, 1], [], []>} : vector<16x32xf32>, vector<32x128xf32>, vector<16x128xf32> -> vector<16x128xf32>
    %3 = math.tanh %2 : vector<16x128xf32>
    %c0_3 = arith.constant 0 : index
    %c0_4 = arith.constant 0 : index
    %4 = vector.load %arg2[%c0_3, %c0_4] : memref<16x128xf32, #tpu.memory_space<vmem>>, vector<16x128xf32>
    tpu.vector_store %arg2[%c0_3, %c0_4], %3 {strides = array<i32>} : memref<16x128xf32, #tpu.memory_space<vmem>>, vector<16x128xf32>,
    return
  }
}

</mosaic_0001>

<llo_original>
// kernel: tpu_custom_call.1
$region0: #{tpu_custom_call.1}
  #allocation0 [shape = 'u32[]', space=smem, size = 0x4, offset = 0x4, fixed_abs, tag = 'smem constant byte address 0x4 - core index']
  #allocation1 [shape = 'u32[144,128]{1,0:T(1,128)}', space=vmem, size = 0x12000, scoped, tag = 'internal scratch']
  %s0 = inlined_call_operand.hbm [shape: f32[16,32], index: 0, kind: input, shape index: {}]
  %s1 = inlined_call_operand.hbm [shape: f32[32,128], index: 1, kind: input, shape index: {}]
  %s2 = inlined_call_operand.hbm [shape: f32[16,128], index: 2, kind: output, shape index: {}]
  %s3 = sld [smem:[#allocation0]]
  $region26: #{tpu_custom_call.1} parent=0
    _
  %s5 = ssub.s32 1, %s3
  %s6 = scalar_select 0, %s5, %s3
  $region1: #{tpu_custom_call.1} parent=0
    #allocation2 [shape = 'u8[8192]{0}', space=vmem, size = 0x2000, scoped, tag = 'input window, operand 0, single buffered']
    #allocation3 [shape = 's32[1]{0}', space=sflag, size = 0x4, scoped, tag = 'scoped memory for tpu_custom_call.1']
    #allocation4 [shape = 's32[1]{0}', space=sflag, size = 0x4, scoped, tag = 'scoped memory for tpu_custom_call.1']
    #allocation5 [shape = 'u8[16384]{0}', space=vmem, size = 0x4000, scoped, tag = 'input window, operand 1, single buffered']
    #allocation6 [shape = 's32[1]{0}', space=sflag, size = 0x4, scoped, tag = 'scoped memory for tpu_custom_call.1']
    #allocation7 [shape = 'u8[8192]{0}', space=vmem, size = 0x2000, scoped, tag = 'output window, operand 0, single buffered']
    %7 = vsyncpa [#allocation3], 0
    %8 = vsyncpa [#allocation6], 0
    %9 = vsyncpa [#allocation4], 0
    // Predicated region
    $region2: #{tpu_custom_call.1} parent=1 // pred_check
      _
    $region3: #{tpu_custom_call.1} parent=1 // pred_check_branch
      %11 = sbr.rel (0) target = $region5
    $region4: #{tpu_custom_call.1} parent=1 // pred_region
      %s13 = ssub.s32 256, 256
      %14 = vsyncadd [#allocation3], %s13
      %s15 = sshll.u32 [#allocation2], 4
      %s16 = int_to_ptr.vmem [resolvable:$true] %s15
      %21 = dma.hbm_to_vmem [thread:$0]  %s0, 256, %s16, [#allocation3], 128, 128, 8
    $region5: #{tpu_custom_call.1} parent=1 // pred_fallthru
      _
    // Predicated region
    $region6: #{tpu_custom_call.1} parent=1 // pred_check
      _
    $region7: #{tpu_custom_call.1} parent=1 // pred_check_branch
      %23 = sbr.rel (0) target = $region9
    $region8: #{tpu_custom_call.1} parent=1 // pred_region
      %s25 = ssub.s32 512, 512
      %26 = vsyncadd [#allocation6], %s25
      %s27 = sshll.u32 [#allocation5], 4
      %s28 = int_to_ptr.vmem [resolvable:$true] %s27
      %33 = dma.hbm_to_vmem [thread:$0]  %s1, 512, %s28, [#allocation6], 128, 128, 8
    $region9: #{tpu_custom_call.1} parent=1 // pred_fallthru
      _
    // Predicated region
    $region10: #{tpu_custom_call.1} parent=1 // pred_check
      _
    $region11: #{tpu_custom_call.1} parent=1 // pred_check_branch
      %35 = sbr.rel (0) target = $region13
    $region12: #{tpu_custom_call.1} parent=1 // pred_region
      %36 = dma.done [#allocation3], 256
    $region13: #{tpu_custom_call.1} parent=1 // pred_fallthru
      _
    // Predicated region
    $region14: #{tpu_custom_call.1} parent=1 // pred_check
      _
    $region15: #{tpu_custom_call.1} parent=1 // pred_check_branch
      %38 = sbr.rel (0) target = $region17
    $region16: #{tpu_custom_call.1} parent=1 // pred_region
      %39 = dma.done [#allocation6], 512
    $region17: #{tpu_custom_call.1} parent=1 // pred_fallthru
      _
    %v40 = vld [vmem:[#allocation2] sm:$0xff]
    %v41 = vld [vmem:[#allocation2 + $0x8] sm:$0xff]
    %v42 = vld [vmem:[#allocation5] sm:$0xff]
    %v43 = vld [vmem:[#allocation5 + $0x8] sm:$0xff]
    %v44 = vld [vmem:[#allocation5 + $0x10] sm:$0xff]
    %v45 = vld [vmem:[#allocation5 + $0x18] sm:$0xff]
    %vm46 = vcmask 261120
    %v48 = vsel %vm46, %v40, 0
    %v51 = vsel %vm46, %v41, 0
    %53 = vmatprep.subr.mxu0 0.0
    %54 = vmatpush1.msra.mxu0 0.0
    %55 = vmatprep.subr.mxu0 0.0
    %56 = vmatpush1.msra.mxu0 0.0
    %57 = vmatprep.subr.mxu0 0.0
    %58 = vmatpush1.msra.mxu0 0.0
    %59 = vmatprep.subr.mxu0 0.0
    %60 = vmatpush1.msra.mxu0 0.0
    %61 = vmatprep.subr.mxu0 0.0
    %62 = vmatpush1.msra.mxu0 0.0
    %63 = vmatprep.subr.mxu0 0.0
    %64 = vmatpush1.msra.mxu0 0.0
    %65 = vmatprep.subr.mxu0 0.0
    %66 = vmatpush1.msra.mxu0 0.0
    %67 = vmatprep.subr.mxu0 0.0
    %68 = vmatpush1.msra.mxu0 0.0
    %69 = vmatprep.subr.mxu0 0.0
    %70 = vmatpush1.msra.mxu0 0.0
    %71 = vmatprep.subr.mxu0 0.0
    %72 = vmatpush1.msra.mxu0 0.0
    %73 = vmatprep.subr.mxu0 0.0
    %74 = vmatpush1.msra.mxu0 0.0
    %75 = vmatprep.subr.mxu0 0.0
    %76 = vmatpush1.msra.mxu0 0.0
    %77 = vmatprep.subr.mxu0 0.0
    %78 = vmatpush1.msra.mxu0 %v45
    %79 = vmatprep.subr.mxu0 0.0
    %80 = vmatpush1.msra.mxu0 %v44
    %81 = vmatprep.subr.mxu0 0.0
    %82 = vmatpush1.msra.mxu0 %v43
    %83 = vmatprep.subr.mxu0 0.0
    %84 = vmatpush1.msra.mxu0 %v42
    %85 = vmatprep.subr.mxu0 0.0
    %86 = vmatpush2.msra.mxu0 0.0
    %87 = vmatprep.subr.mxu0 0.0
    %88 = vmatpush2.msra.mxu0 0.0
    %89 = vmatprep.subr.mxu0 0.0
    %90 = vmatpush2.msra.mxu0 0.0
    %91 = vmatprep.subr.mxu0 0.0
    %92 = vmatpush2.msra.mxu0 0.0
    %93 = vmatprep.subr.mxu0 0.0
    %94 = vmatpush2.msra.mxu0 0.0
    %95 = vmatprep.subr.mxu0 0.0
    %96 = vmatpush2.msra.mxu0 0.0
    %97 = vmatprep.subr.mxu0 0.0
    %98 = vmatpush2.msra.mxu0 0.0
    %99 = vmatprep.subr.mxu0 0.0
    %100 = vmatpush2.msra.mxu0 0.0
    %101 = vmatprep.subr.mxu0 0.0
    %102 = vmatpush2.msra.mxu0 0.0
    %103 = vmatprep.subr.mxu0 0.0
    %104 = vmatpush2.msra.mxu0 0.0
    %105 = vmatprep.subr.mxu0 0.0
    %106 = vmatpush2.msra.mxu0 0.0
    %107 = vmatprep.subr.mxu0 0.0
    %108 = vmatpush2.msra.mxu0 0.0
    %109 = vmatprep.subr.mxu0 0.0
    %110 = vmatpush2.msra.mxu0 0.0
    %111 = vmatprep.subr.mxu0 0.0
    %112 = vmatpush2.msra.mxu0 0.0
    %113 = vmatprep.subr.mxu0 0.0
    %114 = vmatpush2.msra.mxu0 0.0
    %115 = vmatprep.subr.mxu0 0.0
    %116 = vmatpush2.msra.mxu0 0.0
    %117 = vmatprep.mubr.f32.mxu0 0.0
    %118 = vmatmul.mubr.f32.gmra.mxu0 %v48
    %v119 = vpop.f32.mrf.mxu0
    %v120 = vadd.f32 0.0, %v119
    %v121 = vpop.f32.mrf.mxu0
    %122 = vmatprep.mubr.f32.mxu0 0.0
    %123 = vmatmul.mubr.f32.gmra.mxu0 %v51
    %v124 = vpop.f32.mrf.mxu0
    %v125 = vadd.f32 0.0, %v124
    %v126 = vpop.f32.mrf.mxu0
    %127 = vdwg.mxu0
    %v128 = vtanh.pop %v120
    %v129 = vtanh.pop %v125
    %130 = vst [vmem:[#allocation7] sm:$0xff] %v128
    %131 = vst [vmem:[#allocation7 + $0x8] sm:$0xff] %v129
    // Predicated region
    $region18: #{tpu_custom_call.1} parent=1 // pred_check
      _
    $region19: #{tpu_custom_call.1} parent=1 // pred_check_branch
      %133 = sbr.rel (0) target = $region21
    $region20: #{tpu_custom_call.1} parent=1 // pred_region
      %s135 = ssub.s32 256, 256
      %136 = vsyncadd [#allocation4], %s135
      %s137 = sshll.u32 [#allocation7], 4
      %s138 = int_to_ptr.vmem [resolvable:$true] %s137
      %143 = dma.vmem_to_hbm [thread:$0]  %s138, 256, %s2, [#allocation4], 128, 128, 8
    $region21: #{tpu_custom_call.1} parent=1 // pred_fallthru
      _
    // Predicated region
    $region22: #{tpu_custom_call.1} parent=1 // pred_check
      _
    $region23: #{tpu_custom_call.1} parent=1 // pred_check_branch
      %145 = sbr.rel (0) target = $region25
    $region24: #{tpu_custom_call.1} parent=1 // pred_region
      %146 = dma.done [#allocation4], 256
    $region25: #{tpu_custom_call.1} parent=1 // pred_fallthru
      _
    %147 = vsyncpa [#allocation3], 1
    %148 = vsyncpa [#allocation6], 1
    %149 = vsyncpa [#allocation4], 1

</llo_original>
